<compile_context>
chip_gen: v7x
topology: tpu7x:2x2x1
jax: 0.10.0
libtpu: 0.0.40
codegen_flags: <defaults>
</compile_context>

<pallas_src>
import jax
import jax.numpy as jnp
from jax.experimental import pallas as pl
from jax.experimental.pallas import tpu as pltpu

# MLP dims from the PyTorch module: 512 -> 256 -> 128 -> 64 -> 32 -> 16 -> 1
DIMS = [512, 256, 128, 64, 32, 16, 1]


def _round_up(x, m):
    return ((x + m - 1) // m) * m


def mlp_kernel(x_ref,
               w1, b1, w2, b2, w3, b3, w4, b4, w5, b5, w6t, b6,
               o_ref):
    # x_ref: (tm, 512) f32; w1..w5 bf16 (din, dout); biases f32 (1, dout);
    # w6t f32 (1, 16); o_ref: (1, tm) f32 (lane-dense output row).
    h = x_ref[...].astype(jnp.bfloat16)          # in-kernel cast, no extra HBM pass
    # Layers 1-4: MXU bf16 matmul, f32 accumulate, bf16 tanh (EUP).
    h = jnp.tanh((jnp.dot(h, w1[...], preferred_element_type=jnp.float32)
                  + b1[...]).astype(jnp.bfloat16))
    h = jnp.tanh((jnp.dot(h, w2[...], preferred_element_type=jnp.float32)
                  + b2[...]).astype(jnp.bfloat16))
    h = jnp.tanh((jnp.dot(h, w3[...], preferred_element_type=jnp.float32)
                  + b3[...]).astype(jnp.bfloat16))
    h = jnp.tanh((jnp.dot(h, w4[...], preferred_element_type=jnp.float32)
                  + b4[...]).astype(jnp.bfloat16))
    # Layer 5 (32 -> 16): keep the activation in f32 for the tail.
    h = jnp.tanh(jnp.dot(h, w5[...], preferred_element_type=jnp.float32) + b5[...])
    # Final 16 -> 1 layer on VPU/XLU: elementwise mul + lane reduce (w6 passed
    # transposed as (1,16)); the MXU would waste a full fill/drain on 1 column.
    z = jnp.sum(h * w6t[...], axis=-1, keepdims=True) + b6[...]      # (tm, 1) f32
    # Lane-dense store: (tm,1) -> (1,tm) on the XLU, then a full-width vst.
    o_ref[...] = jnp.transpose(z).astype(o_ref.dtype)


def neural_network_forward(x, params, *, tm_cap=512):
    """Pallas forward pass of NeuralNetwork. x: [B, 512] f32 -> returns [B] f32.

    tm_cap: upper bound on the batch tile (multiple of 128). On v7x prefer a
    cap that gives >=2 grid steps per TensorCore (e.g. 256 for B=1024); on
    single-TC v5e/v6e keep it large (512-1024).
    """
    B, D = x.shape
    assert D == DIMS[0]
    tm_cap = max(128, _round_up(tm_cap, 128))

    # Adaptive batch tile: minimal padding for small/ragged batches, lane-dense
    # (multiple of 128) tiles once the batch spans several tiles.
    if B <= tm_cap:
        n_tiles = 1
        tm = _round_up(max(B, 1), 8)          # single tile, pad only to sublane
    else:
        n_tiles = pl.cdiv(B, tm_cap)
        tm = min(_round_up(pl.cdiv(B, n_tiles), 128), tm_cap)
    b_pad = n_tiles * tm

    x_p = x if b_pad == B else jnp.pad(x, ((0, b_pad - B), (0, 0)))

    kernel_args = [x_p]
    in_specs = [pl.BlockSpec((tm, DIMS[0]), lambda i: (i, 0))]
    n_layers = len(DIMS) - 1
    for li, (din, dout) in enumerate(zip(DIMS[:-1], DIMS[1:])):
        w = params[2 * li]
        b = params[2 * li + 1].reshape(1, dout).astype(jnp.float32)
        if li < n_layers - 1:
            kernel_args.append(w.astype(jnp.bfloat16))            # (din, dout) bf16
            in_specs.append(pl.BlockSpec((din, dout), lambda i: (0, 0)))
        else:
            # Last layer (16 -> 1): pass W^T as (1, 16) f32 for the VPU reduce.
            kernel_args.append(jnp.transpose(w).astype(jnp.float32))
            in_specs.append(pl.BlockSpec((1, din), lambda i: (0, 0)))
        kernel_args.append(b)                                      # (1, dout) f32
        in_specs.append(pl.BlockSpec((1, dout), lambda i: (0, 0)))

    out_spec = pl.BlockSpec((1, tm), lambda i: (i, 0))             # lane-dense row
    grid = (n_tiles,)

    mac = sum(din * dout for din, dout in zip(DIMS[:-1], DIMS[1:]))      # 174608
    w_bytes = (sum(din * dout * 2 for din, dout in zip(DIMS[:-2], DIMS[1:-1]))
               + DIMS[-2] * DIMS[-1] * 4)
    b_bytes = sum(d * 4 for d in DIMS[1:])
    cost = pl.CostEstimate(
        flops=2 * b_pad * mac,
        transcendentals=b_pad * sum(DIMS[1:-1]),
        bytes_accessed=b_pad * DIMS[0] * 4 + b_pad * 4 + w_bytes + b_bytes,
    )

    out = pl.pallas_call(
        mlp_kernel,
        out_shape=jax.ShapeDtypeStruct((n_tiles, tm), jnp.float32),
        grid_spec=pltpu.PrefetchScalarGridSpec(
            num_scalar_prefetch=0,
            grid=grid,
            in_specs=in_specs,
            out_specs=out_spec,
        ),
        compiler_params=pltpu.CompilerParams(
            dimension_semantics=("parallel",)),
        cost_estimate=cost,
    )(*kernel_args)

    # torch: self.network(x).squeeze(1)  (flatten tiles, drop batch padding)
    return out.reshape(b_pad)[:B]


def init_params(key):
    """Deterministic parameter init (shapes match the nn.Linear layers, stored (in,out))."""
    params = []
    for din, dout in zip(DIMS[:-1], DIMS[1:]):
        key, kw, kb = jax.random.split(key, 3)
        bound = 1.0 / jnp.sqrt(din)  # PyTorch default Linear init range
        w = jax.random.uniform(kw, (din, dout), jnp.float32, -bound, bound)
        b = jax.random.uniform(kb, (dout,), jnp.float32, -bound, bound)
        params.extend([w, b])
    return params


def reference_forward_f32(x, params):
    """Pure-f32 reference matching the PyTorch module semantics."""
    h = x
    for li in range(6):
        w, b = params[2 * li], params[2 * li + 1]
        h = h @ w + b
        if li < 5:
            h = jnp.tanh(h)
    return h[:, 0]


def reference_forward_bf16(x, params):
    """Reference mirroring the kernel's bf16 matmul / bf16-tanh numerics."""
    h = x.astype(jnp.bfloat16)
    for li in range(5):
        w = params[2 * li].astype(jnp.bfloat16)
        b = params[2 * li + 1].astype(jnp.float32)
        z = jnp.dot(h, w, preferred_element_type=jnp.float32) + b
        h = jnp.tanh(z.astype(jnp.bfloat16)) if li < 4 else jnp.tanh(z)
    w6 = params[10].astype(jnp.float32)
    b6 = params[11].astype(jnp.float32)
    return jnp.sum(h.astype(jnp.float32) * w6[:, 0][None, :], axis=-1) + b6[0]


if __name__ == "__main__":
    key = jax.random.PRNGKey(0)
    kx, kp = jax.random.split(key)
    params = init_params(kp)

    # Small smoke test: single sublane-rounded tile, no wasted padding.
    B_small = 8
    x_small = jax.random.normal(kx, (B_small, DIMS[0]), jnp.float32)
    y_small = jax.block_until_ready(neural_network_forward(x_small, params))
    assert y_small.shape == (B_small,)
    assert jnp.allclose(y_small, reference_forward_bf16(x_small, params),
                        atol=1e-2, rtol=1e-2)
    assert jnp.allclose(y_small, reference_forward_f32(x_small, params),
                        atol=8e-2, rtol=8e-2)

    # Ragged multi-tile batch: B=640 -> 2 grid steps of tm=384 (b_pad=768),
    # exercising the parallel grid, lane-dense stores and the [:B] slice.
    B_big = 640
    x_big = jax.random.normal(kx, (B_big, DIMS[0]), jnp.float32)
    y_big = jax.block_until_ready(neural_network_forward(x_big, params, tm_cap=512))
    assert y_big.shape == (B_big,)
    assert jnp.allclose(y_big, reference_forward_bf16(x_big, params),
                        atol=1e-2, rtol=1e-2)
    assert jnp.allclose(y_big, reference_forward_f32(x_big, params),
                        atol=8e-2, rtol=8e-2)

    print("KERNEL_OK")
</pallas_src>

<mosaic_0001>
module attributes {stable_mosaic.version = 11 : i64} {
  func.func @mlp_kernel(%arg0: i32, %arg1: memref<8x512xf32, #tpu.memory_space<vmem>>, %arg2: memref<512x256xbf16, #tpu.memory_space<vmem>>, %arg3: memref<1x256xf32, #tpu.memory_space<vmem>>, %arg4: memref<256x128xbf16, #tpu.memory_space<vmem>>, %arg5: memref<1x128xf32, #tpu.memory_space<vmem>>, %arg6: memref<128x64xbf16, #tpu.memory_space<vmem>>, %arg7: memref<1x64xf32, #tpu.memory_space<vmem>>, %arg8: memref<64x32xbf16, #tpu.memory_space<vmem>>, %arg9: memref<1x32xf32, #tpu.memory_space<vmem>>, %arg10: memref<32x16xbf16, #tpu.memory_space<vmem>>, %arg11: memref<1x16xf32, #tpu.memory_space<vmem>>, %arg12: memref<1x16xf32, #tpu.memory_space<vmem>>, %arg13: memref<1x1xf32, #tpu.memory_space<vmem>>, %arg14: memref<1x8xf32, #tpu.memory_space<vmem>>) attributes {dimension_semantics = [#tpu.dimension_semantics<parallel>], iteration_bounds = array<i64: 1>, scalar_prefetch = 0 : i64, scratch_operands = 0 : i64, tpu.core_type = #tpu.core_type<tc>, window_params = [{transform_indices = @transform_0, window_bounds = array<i64: 8, 512>}, {pipeline_mode = #tpu.pipeline_mode<synchronous>, transform_indices = @transform_1, window_bounds = array<i64: 512, 256>}, {pipeline_mode = #tpu.pipeline_mode<synchronous>, transform_indices = @transform_2, window_bounds = array<i64: 1, 256>}, {pipeline_mode = #tpu.pipeline_mode<synchronous>, transform_indices = @transform_3, window_bounds = array<i64: 256, 128>}, {pipeline_mode = #tpu.pipeline_mode<synchronous>, transform_indices = @transform_4, window_bounds = array<i64: 1, 128>}, {pipeline_mode = #tpu.pipeline_mode<synchronous>, transform_indices = @transform_5, window_bounds = array<i64: 128, 64>}, {pipeline_mode = #tpu.pipeline_mode<synchronous>, transform_indices = @transform_6, window_bounds = array<i64: 1, 64>}, {pipeline_mode = #tpu.pipeline_mode<synchronous>, transform_indices = @transform_7, window_bounds = array<i64: 64, 32>}, {pipeline_mode = #tpu.pipeline_mode<synchronous>, transform_indices = @transform_8, window_bounds = array<i64: 1, 32>}, {pipeline_mode = #tpu.pipeline_mode<synchronous>, transform_indices = @transform_9, window_bounds = array<i64: 32, 16>}, {pipeline_mode = #tpu.pipeline_mode<synchronous>, transform_indices = @transform_10, window_bounds = array<i64: 1, 16>}, {pipeline_mode = #tpu.pipeline_mode<synchronous>, transform_indices = @transform_11, window_bounds = array<i64: 1, 16>}, {pipeline_mode = #tpu.pipeline_mode<synchronous>, transform_indices = @transform_12, window_bounds = array<i64: 1, 1>}, {transform_indices = @transform_13, window_bounds = array<i64: 1, 8>}]} {
    %c0 = arith.constant 0 : index
    %c0_0 = arith.constant 0 : index
    %0 = vector.load %arg1[%c0, %c0_0] : memref<8x512xf32, #tpu.memory_space<vmem>>, vector<8x512xf32>
    %1 = arith.truncf %0 : vector<8x512xf32> to vector<8x512xbf16>
    %c0_1 = arith.constant 0 : index
    %c0_2 = arith.constant 0 : index
    %2 = vector.load %arg2[%c0_1, %c0_2] : memref<512x256xbf16, #tpu.memory_space<vmem>>, vector<512x256xbf16>
    %cst = arith.constant dense<0.000000e+00> : vector<8x256xf32>
    %3 = tpu.matmul %1, %2, %cst {dimension_numbers = #tpu.dot_dimension_numbers<[1], [0], [0], [1], [0, 0, 1, 1], [], []>} : vector<8x512xbf16>, vector<512x256xbf16>, vector<8x256xf32> -> vector<8x256xf32>
    %c0_3 = arith.constant 0 : index
    %c0_4 = arith.constant 0 : index
    %4 = vector.load %arg3[%c0_3, %c0_4] : memref<1x256xf32, #tpu.memory_space<vmem>>, vector<1x256xf32>
    %5 = vector.broadcast %4 : vector<1x256xf32> to vector<8x256xf32>
    %6 = arith.addf %3, %5 : vector<8x256xf32>
    %7 = arith.truncf %6 : vector<8x256xf32> to vector<8x256xbf16>
    %8 = math.tanh %7 : vector<8x256xbf16>
    %c0_5 = arith.constant 0 : index
    %c0_6 = arith.constant 0 : index
    %9 = vector.load %arg4[%c0_5, %c0_6] : memref<256x128xbf16, #tpu.memory_space<vmem>>, vector<256x128xbf16>
    %cst_7 = arith.constant dense<0.000000e+00> : vector<8x128xf32>
    %10 = tpu.matmul %8, %9, %cst_7 {dimension_numbers = #tpu.dot_dimension_numbers<[1], [0], [0], [1], [0, 0, 1, 1], [], []>} : vector<8x256xbf16>, vector<256x128xbf16>, vector<8x128xf32> -> vector<8x128xf32>
    %c0_8 = arith.constant 0 : index
    %c0_9 = arith.constant 0 : index
    %11 = vector.load %arg5[%c0_8, %c0_9] : memref<1x128xf32, #tpu.memory_space<vmem>>, vector<1x128xf32>
    %12 = vector.broadcast %11 : vector<1x128xf32> to vector<8x128xf32>
    %13 = arith.addf %10, %12 : vector<8x128xf32>
    %14 = arith.truncf %13 : vector<8x128xf32> to vector<8x128xbf16>
    %15 = math.tanh %14 : vector<8x128xbf16>
    %c0_10 = arith.constant 0 : index
    %c0_11 = arith.constant 0 : index
    %16 = vector.load %arg6[%c0_10, %c0_11] : memref<128x64xbf16, #tpu.memory_space<vmem>>, vector<128x64xbf16>
    %cst_12 = arith.constant dense<0.000000e+00> : vector<8x64xf32>
    %17 = tpu.matmul %15, %16, %cst_12 {dimension_numbers = #tpu.dot_dimension_numbers<[1], [0], [0], [1], [0, 0, 1, 1], [], []>} : vector<8x128xbf16>, vector<128x64xbf16>, vector<8x64xf32> -> vector<8x64xf32>
    %c0_13 = arith.constant 0 : index
    %c0_14 = arith.constant 0 : index
    %18 = vector.load %arg7[%c0_13, %c0_14] : memref<1x64xf32, #tpu.memory_space<vmem>>, vector<1x64xf32>
    %19 = vector.broadcast %18 : vector<1x64xf32> to vector<8x64xf32>
    %20 = arith.addf %17, %19 : vector<8x64xf32>
    %21 = arith.truncf %20 : vector<8x64xf32> to vector<8x64xbf16>
    %22 = math.tanh %21 : vector<8x64xbf16>
    %c0_15 = arith.constant 0 : index
    %c0_16 = arith.constant 0 : index
    %23 = vector.load %arg8[%c0_15, %c0_16] : memref<64x32xbf16, #tpu.memory_space<vmem>>, vector<64x32xbf16>
    %cst_17 = arith.constant dense<0.000000e+00> : vector<8x32xf32>
    %24 = tpu.matmul %22, %23, %cst_17 {dimension_numbers = #tpu.dot_dimension_numbers<[1], [0], [0], [1], [0, 0, 1, 1], [], []>} : vector<8x64xbf16>, vector<64x32xbf16>, vector<8x32xf32> -> vector<8x32xf32>
    %c0_18 = arith.constant 0 : index
    %c0_19 = arith.constant 0 : index
    %25 = vector.load %arg9[%c0_18, %c0_19] : memref<1x32xf32, #tpu.memory_space<vmem>>, vector<1x32xf32>
    %26 = vector.broadcast %25 : vector<1x32xf32> to vector<8x32xf32>
    %27 = arith.addf %24, %26 : vector<8x32xf32>
    %28 = arith.truncf %27 : vector<8x32xf32> to vector<8x32xbf16>
    %29 = math.tanh %28 : vector<8x32xbf16>
    %c0_20 = arith.constant 0 : index
    %c0_21 = arith.constant 0 : index
    %30 = vector.load %arg10[%c0_20, %c0_21] : memref<32x16xbf16, #tpu.memory_space<vmem>>, vector<32x16xbf16>
    %cst_22 = arith.constant dense<0.000000e+00> : vector<8x16xf32>
    %31 = tpu.matmul %29, %30, %cst_22 {dimension_numbers = #tpu.dot_dimension_numbers<[1], [0], [0], [1], [0, 0, 1, 1], [], []>} : vector<8x32xbf16>, vector<32x16xbf16>, vector<8x16xf32> -> vector<8x16xf32>
    %c0_23 = arith.constant 0 : index
    %c0_24 = arith.constant 0 : index
    %32 = vector.load %arg11[%c0_23, %c0_24] : memref<1x16xf32, #tpu.memory_space<vmem>>, vector<1x16xf32>
    %33 = vector.broadcast %32 : vector<1x16xf32> to vector<8x16xf32>
    %34 = arith.addf %31, %33 : vector<8x16xf32>
    %35 = math.tanh %34 : vector<8x16xf32>
    %c0_25 = arith.constant 0 : index
    %c0_26 = arith.constant 0 : index
    %36 = vector.load %arg12[%c0_25, %c0_26] : memref<1x16xf32, #tpu.memory_space<vmem>>, vector<1x16xf32>
    %37 = vector.broadcast %36 : vector<1x16xf32> to vector<8x16xf32>
    %38 = arith.mulf %35, %37 : vector<8x16xf32>
    %cst_27 = arith.constant dense<0.000000e+00> : vector<8xf32>
    %39 = vector.multi_reduction <add>, %38, %cst_27 [1] : vector<8x16xf32> to vector<8xf32>
    %40 = vector.shape_cast %39 : vector<8xf32> to vector<8x1xf32>
    %c0_28 = arith.constant 0 : index
    %c0_29 = arith.constant 0 : index
    %41 = vector.load %arg13[%c0_28, %c0_29] : memref<1x1xf32, #tpu.memory_space<vmem>>, vector<1x1xf32>
    %42 = vector.broadcast %41 : vector<1x1xf32> to vector<8x1xf32>
    %43 = arith.addf %40, %42 : vector<8x1xf32>
    %44 = tpu.transpose %43, [1, 0] : vector<8x1xf32> -> vector<1x8xf32>
    %c0_30 = arith.constant 0 : index
    %c0_31 = arith.constant 0 : index
    %45 = vector.load %arg14[%c0_30, %c0_31] : memref<1x8xf32, #tpu.memory_space<vmem>>, vector<1x8xf32>
    tpu.vector_store %arg14[%c0_30, %c0_31], %44 {strides = array<i32>} : memref<1x8xf32, #tpu.memory_space<vmem>>, vector<1x8xf32>,
    return
  }
  func.func @transform_0(%arg0: i32) -> (i32, i32) {
    %c0_i32 = arith.constant 0 : i32
    %c0_i32_0 = arith.constant 0 : i32
    return %arg0, %c0_i32 : i32, i32
  }
  func.func @transform_1(%arg0: i32) -> (i32, i32) {
    %c0_i32 = arith.constant 0 : i32
    %c0_i32_0 = arith.constant 0 : i32
    %c0_i32_1 = arith.constant 0 : i32
    return %c0_i32, %c0_i32_0 : i32, i32
  }
  func.func @transform_2(%arg0: i32) -> (i32, i32) {
    %c0_i32 = arith.constant 0 : i32
    %c0_i32_0 = arith.constant 0 : i32
    %c0_i32_1 = arith.constant 0 : i32
    return %c0_i32, %c0_i32_0 : i32, i32
  }
  func.func @transform_3(%arg0: i32) -> (i32, i32) {
    %c0_i32 = arith.constant 0 : i32
    %c0_i32_0 = arith.constant 0 : i32
    %c0_i32_1 = arith.constant 0 : i32
    return %c0_i32, %c0_i32_0 : i32, i32
  }
  func.func @transform_4(%arg0: i32) -> (i32, i32) {
    %c0_i32 = arith.constant 0 : i32
    %c0_i32_0 = arith.constant 0 : i32
    %c0_i32_1 = arith.constant 0 : i32
    return %c0_i32, %c0_i32_0 : i32, i32
  }
  func.func @transform_5(%arg0: i32) -> (i32, i32) {
    %c0_i32 = arith.constant 0 : i32
    %c0_i32_0 = arith.constant 0 : i32
    %c0_i32_1 = arith.constant 0 : i32
    return %c0_i32, %c0_i32_0 : i32, i32
  }
  func.func @transform_6(%arg0: i32) -> (i32, i32) {
    %c0_i32 = arith.constant 0 : i32
    %c0_i32_0 = arith.constant 0 : i32
    %c0_i32_1 = arith.constant 0 : i32
    return %c0_i32, %c0_i32_0 : i32, i32
  }
  func.func @transform_7(%arg0: i32) -> (i32, i32) {
    %c0_i32 = arith.constant 0 : i32
    %c0_i32_0 = arith.constant 0 : i32
    %c0_i32_1 = arith.constant 0 : i32
    return %c0_i32, %c0_i32_0 : i32, i32
  }
  func.func @transform_8(%arg0: i32) -> (i32, i32) {
    %c0_i32 = arith.constant 0 : i32
    %c0_i32_0 = arith.constant 0 : i32
    %c0_i32_1 = arith.constant 0 : i32
    return %c0_i32, %c0_i32_0 : i32, i32
  }
  func.func @transform_9(%arg0: i32) -> (i32, i32) {
    %c0_i32 = arith.constant 0 : i32
    %c0_i32_0 = arith.constant 0 : i32
    %c0_i32_1 = arith.constant 0 : i32
    return %c0_i32, %c0_i32_0 : i32, i32
  }
  func.func @transform_10(%arg0: i32) -> (i32, i32) {
    %c0_i32 = arith.constant 0 : i32
    %c0_i32_0 = arith.constant 0 : i32
    %c0_i32_1 = arith.constant 0 : i32
    return %c0_i32, %c0_i32_0 : i32, i32
  }
  func.func @transform_11(%arg0: i32) -> (i32, i32) {
    %c0_i32 = arith.constant 0 : i32
    %c0_i32_0 = arith.constant 0 : i32
    %c0_i32_1 = arith.constant 0 : i32
    return %c0_i32, %c0_i32_0 : i32, i32
  }
  func.func @transform_12(%arg0: i32) -> (i32, i32) {
    %c0_i32 = arith.constant 0 : i32
    %c0_i32_0 = arith.constant 0 : i32
    %c0_i32_1 = arith.constant 0 : i32
    return %c0_i32, %c0_i32_0 : i32, i32
  }
  func.func @transform_13(%arg0: i32) -> (i32, i32) {
    %c0_i32 = arith.constant 0 : i32
    %c0_i32_0 = arith.constant 0 : i32
    return %arg0, %c0_i32 : i32, i32
  }
}

</mosaic_0001>

<llo_original>
// kernel: tpu_custom_call.1
$region0: #{tpu_custom_call.1}
  #allocation0 [shape = 'u32[]', space=smem, size = 0x4, offset = 0x4, fixed_abs, tag = 'smem constant byte address 0x4 - core index']
  #allocation1 [shape = 'u32[144,128]{1,0:T(1,128)}', space=vmem, size = 0x12000, scoped, tag = 'internal scratch']
  #allocation2 [shape = 'f32[1,1]{1,0:T(1,128)S(1)}', space=vmem, size = 0x200, scoped, tag = 'scoped memory for tpu_custom_call.1']
  %s0 = inlined_call_operand.hbm [shape: f32[8,512], index: 0, kind: input, shape index: {}]
  %s1 = inlined_call_operand.hbm [shape: bf16[512,256], index: 1, kind: input, shape index: {}]
  %s2 = inlined_call_operand.vmem [shape: f32[1,256], index: 2, kind: input, shape index: {}]
  %s3 = inlined_call_operand.vmem [shape: bf16[256,128], index: 3, kind: input, shape index: {}]
  %s4 = inlined_call_operand.vmem [shape: f32[1,128], index: 4, kind: input, shape index: {}]
  %s5 = inlined_call_operand.vmem [shape: bf16[128,64], index: 5, kind: input, shape index: {}]
  %s6 = inlined_call_operand.vmem [shape: f32[1,64], index: 6, kind: input, shape index: {}]
  %s7 = inlined_call_operand.vmem [shape: bf16[64,32], index: 7, kind: input, shape index: {}]
  %s8 = inlined_call_operand.vmem [shape: f32[1,32], index: 8, kind: input, shape index: {}]
  %s9 = inlined_call_operand.vmem [shape: bf16[32,16], index: 9, kind: input, shape index: {}]
  %s10 = inlined_call_operand.vmem [shape: f32[1,16], index: 10, kind: input, shape index: {}]
  %s11 = inlined_call_operand.vmem [shape: f32[1,16], index: 11, kind: input, shape index: {}]
  %s12 = inlined_call_operand.<no memory space> [shape: f32[1,1], index: 12, kind: input, shape index: {}]
  %s13 = inlined_call_operand.hbm [shape: f32[1,8], index: 13, kind: output, shape index: {}]
  %s14 = sld [smem:[#allocation0]]
  $region70: #{tpu_custom_call.1} parent=0
    _
  %s16 = ssub.s32 1, %s14
  %s17 = scalar_select 0, %s16, %s14
  %v18 = vstv %s12
  %19 = vst [vmem:[#allocation2] sm:$0x1] %v18
  $region1: #{tpu_custom_call.1} parent=0
    #allocation3 [shape = 'u8[16384]{0}', space=vmem, size = 0x4000, scoped, tag = 'input window, operand 0, single buffered']
    #allocation4 [shape = 's32[1]{0}', space=sflag, size = 0x4, scoped, tag = 'scoped memory for tpu_custom_call.1']
    #allocation5 [shape = 's32[1]{0}', space=sflag, size = 0x4, scoped, tag = 'scoped memory for tpu_custom_call.1']
    #allocation6 [shape = 'u8[262144]{0}', space=vmem, size = 0x40000, scoped, tag = 'input window, operand 1, single buffered']
    #allocation7 [shape = 's32[1]{0}', space=sflag, size = 0x4, scoped, tag = 'scoped memory for tpu_custom_call.1']
    #allocation8 [shape = 'u8[512]{0}', space=vmem, size = 0x400, scoped, tag = 'output window, operand 0, single buffered']
    %20 = vsyncpa [#allocation4], 0
    %21 = vsyncpa [#allocation7], 0
    %22 = vsyncpa [#allocation5], 0
    // Predicated region
    $region2: #{tpu_custom_call.1} parent=1 // pred_check
      _
    $region3: #{tpu_custom_call.1} parent=1 // pred_check_branch
      %24 = sbr.rel (0) target = $region5
    $region4: #{tpu_custom_call.1} parent=1 // pred_region
      %s26 = ssub.s32 512, 512
      %27 = vsyncadd [#allocation4], %s26
      %s29 = sshll.u32 [#allocation3], 4
      %s30 = int_to_ptr.vmem [resolvable:$true] %s29
      %32 = dma.hbm_to_vmem [thread:$0]  %s0, 512, %s30, [#allocation4]
    $region5: #{tpu_custom_call.1} parent=1 // pred_fallthru
      _
    // Predicated region
    $region6: #{tpu_custom_call.1} parent=1 // pred_check
      _
    $region7: #{tpu_custom_call.1} parent=1 // pred_check_branch
      %34 = sbr.rel (0) target = $region9
    $region8: #{tpu_custom_call.1} parent=1 // pred_region
      %s36 = ssub.s32 8192, 8192
      %37 = vsyncadd [#allocation7], %s36
      %s38 = sshll.u32 [#allocation6], 4
      %s39 = int_to_ptr.vmem [resolvable:$true] %s38
      %44 = dma.hbm_to_vmem [thread:$0]  %s1, 8192, %s39, [#allocation7], 128, 128, 8
    $region9: #{tpu_custom_call.1} parent=1 // pred_fallthru
      _
    // Predicated region
    $region10: #{tpu_custom_call.1} parent=1 // pred_check
      _
    $region11: #{tpu_custom_call.1} parent=1 // pred_check_branch
      %46 = sbr.rel (0) target = $region13
    $region12: #{tpu_custom_call.1} parent=1 // pred_region
      _
    $region13: #{tpu_custom_call.1} parent=1 // pred_fallthru
      _
    // Predicated region
    $region14: #{tpu_custom_call.1} parent=1 // pred_check
      _
    $region15: #{tpu_custom_call.1} parent=1 // pred_check_branch
      %48 = sbr.rel (0) target = $region17
    $region16: #{tpu_custom_call.1} parent=1 // pred_region
      _
    $region17: #{tpu_custom_call.1} parent=1 // pred_fallthru
      _
    // Predicated region
    $region18: #{tpu_custom_call.1} parent=1 // pred_check
      _
    $region19: #{tpu_custom_call.1} parent=1 // pred_check_branch
      %50 = sbr.rel (0) target = $region21
    $region20: #{tpu_custom_call.1} parent=1 // pred_region
      _
    $region21: #{tpu_custom_call.1} parent=1 // pred_fallthru
      _
    // Predicated region
    $region22: #{tpu_custom_call.1} parent=1 // pred_check
      _
    $region23: #{tpu_custom_call.1} parent=1 // pred_check_branch
      %52 = sbr.rel (0) target = $region25
    $region24: #{tpu_custom_call.1} parent=1 // pred_region
      _
    $region25: #{tpu_custom_call.1} parent=1 // pred_fallthru
      _
    // Predicated region
    $region26: #{tpu_custom_call.1} parent=1 // pred_check
      _
    $region27: #{tpu_custom_call.1} parent=1 // pred_check_branch
      %54 = sbr.rel (0) target = $region29
    $region28: #{tpu_custom_call.1} parent=1 // pred_region
      _
    $region29: #{tpu_custom_call.1} parent=1 // pred_fallthru
      _
    // Predicated region
    $region30: #{tpu_custom_call.1} parent=1 // pred_check
      _
    $region31: #{tpu_custom_call.1} parent=1 // pred_check_branch
      %56 = sbr.rel (0) target = $region33
    $region32: #{tpu_custom_call.1} parent=1 // pred_region
      _
    $region33: #{tpu_custom_call.1} parent=1 // pred_fallthru
      _
    // Predicated region
    $region34: #{tpu_custom_call.1} parent=1 // pred_check
      _
    $region35: #{tpu_custom_call.1} parent=1 // pred_check_branch
      %58 = sbr.rel (0) target = $region37
    $region36: #{tpu_custom_call.1} parent=1 // pred_region
      _
    $region37: #{tpu_custom_call.1} parent=1 // pred_fallthru
      _
    // Predicated region
    $region38: #{tpu_custom_call.1} parent=1 // pred_check
      _
    $region39: #{tpu_custom_call.1} parent=1 // pred_check_branch
      %60 = sbr.rel (0) target = $region41
    $region40: #{tpu_custom_call.1} parent=1 // pred_region
      _
    $region41: #{tpu_custom_call.1} parent=1 // pred_fallthru
      _
    // Predicated region
    $region42: #{tpu_custom_call.1} parent=1 // pred_check
      _
    $region43: #{tpu_custom_call.1} parent=1 // pred_check_branch
      %62 = sbr.rel (0) target = $region45
    $region44: #{tpu_custom_call.1} parent=1 // pred_region
      _
    $region45: #{tpu_custom_call.1} parent=1 // pred_fallthru
      _
    // Predicated region
    $region46: #{tpu_custom_call.1} parent=1 // pred_check
      _
    $region47: #{tpu_custom_call.1} parent=1 // pred_check_branch
      %64 = sbr.rel (0) target = $region49
    $region48: #{tpu_custom_call.1} parent=1 // pred_region
      _
    $region49: #{tpu_custom_call.1} parent=1 // pred_fallthru
      _
    // Predicated region
    $region50: #{tpu_custom_call.1} parent=1 // pred_check
      _
    $region51: #{tpu_custom_call.1} parent=1 // pred_check_branch
      %66 = sbr.rel (0) target = $region53
    $region52: #{tpu_custom_call.1} parent=1 // pred_region
      _
    $region53: #{tpu_custom_call.1} parent=1 // pred_fallthru
      _
    // Predicated region
    $region54: #{tpu_custom_call.1} parent=1 // pred_check
      _
    $region55: #{tpu_custom_call.1} parent=1 // pred_check_branch
      %68 = sbr.rel (0) target = $region57
    $region56: #{tpu_custom_call.1} parent=1 // pred_region
      %69 = dma.done [#allocation4], 512
    $region57: #{tpu_custom_call.1} parent=1 // pred_fallthru
      _
    // Predicated region
    $region58: #{tpu_custom_call.1} parent=1 // pred_check
      _
    $region59: #{tpu_custom_call.1} parent=1 // pred_check_branch
      %71 = sbr.rel (0) target = $region61
    $region60: #{tpu_custom_call.1} parent=1 // pred_region
      %72 = dma.done [#allocation7], 8192
    $region61: #{tpu_custom_call.1} parent=1 // pred_fallthru
      _
    %v74 = vld [vmem:[#allocation3] sm:$0xff]
    %v75 = vld [vmem:[#allocation3 + $0x8] sm:$0xff]
    %v76 = vld [vmem:[#allocation3 + $0x10] sm:$0xff]
    %v77 = vld [vmem:[#allocation3 + $0x18] sm:$0xff]
    %v78 = vpack.c.bf16 %v74, %v74
    %v79 = vpack.c.bf16 %v75, %v75
    %v80 = vpack.c.bf16 %v76, %v76
    %v81 = vpack.c.bf16 %v77, %v77
    %v82 = vld [vmem:[#allocation6] sm:$0xff]
    %v83 = vld [vmem:[#allocation6 + $0x8] sm:$0xff]
    %v84 = vld [vmem:[#allocation6 + $0x10] sm:$0xff]
    %v85 = vld [vmem:[#allocation6 + $0x18] sm:$0xff]
    %v86 = vld [vmem:[#allocation6 + $0x20] sm:$0xff]
    %v87 = vld [vmem:[#allocation6 + $0x28] sm:$0xff]
    %v88 = vld [vmem:[#allocation6 + $0x30] sm:$0xff]
    %v89 = vld [vmem:[#allocation6 + $0x38] sm:$0xff]
    %v90 = vld [vmem:[#allocation6 + $0x40] sm:$0xff]
    %v91 = vld [vmem:[#allocation6 + $0x48] sm:$0xff]
    %v92 = vld [vmem:[#allocation6 + $0x50] sm:$0xff]
    %v93 = vld [vmem:[#allocation6 + $0x58] sm:$0xff]
    %v94 = vld [vmem:[#allocation6 + $0x60] sm:$0xff]
    %v95 = vld [vmem:[#allocation6 + $0x68] sm:$0xff]
    %v96 = vld [vmem:[#allocation6 + $0x70] sm:$0xff]
    %v97 = vld [vmem:[#allocation6 + $0x78] sm:$0xff]
    %v98 = vld [vmem:[#allocation6 + $0x80] sm:$0xff]
    %v99 = vld [vmem:[#allocation6 + $0x88] sm:$0xff]
    %v100 = vld [vmem:[#allocation6 + $0x90] sm:$0xff]
    %v101 = vld [vmem:[#allocation6 + $0x98] sm:$0xff]
    %v102 = vld [vmem:[#allocation6 + $0xa0] sm:$0xff]
    %v103 = vld [vmem:[#allocation6 + $0xa8] sm:$0xff]
    %v104 = vld [vmem:[#allocation6 + $0xb0] sm:$0xff]
    %v105 = vld [vmem:[#allocation6 + $0xb8] sm:$0xff]
    %v106 = vld [vmem:[#allocation6 + $0xc0] sm:$0xff]
    %v107 = vld [vmem:[#allocation6 + $0xc8] sm:$0xff]
    %v108 = vld [vmem:[#allocation6 + $0xd0] sm:$0xff]
    %v109 = vld [vmem:[#allocation6 + $0xd8] sm:$0xff]
    %v110 = vld [vmem:[#allocation6 + $0xe0] sm:$0xff]
    %v111 = vld [vmem:[#allocation6 + $0xe8] sm:$0xff]
    %v112 = vld [vmem:[#allocation6 + $0xf0] sm:$0xff]
    %v113 = vld [vmem:[#allocation6 + $0xf8] sm:$0xff]
    %v114 = vld [vmem:[#allocation6 + $0x100] sm:$0xff]
    %v115 = vld [vmem:[#allocation6 + $0x108] sm:$0xff]
    %v116 = vld [vmem:[#allocation6 + $0x110] sm:$0xff]
    %v117 = vld [vmem:[#allocation6 + $0x118] sm:$0xff]
    %v118 = vld [vmem:[#allocation6 + $0x120] sm:$0xff]
    %v119 = vld [vmem:[#allocation6 + $0x128] sm:$0xff]
    %v120 = vld [vmem:[#allocation6 + $0x130] sm:$0xff]
    %v121 = vld [vmem:[#allocation6 + $0x138] sm:$0xff]
    %v122 = vld [vmem:[#allocation6 + $0x140] sm:$0xff]
    %v123 = vld [vmem:[#allocation6 + $0x148] sm:$0xff]
    %v124 = vld [vmem:[#allocation6 + $0x150] sm:$0xff]
    %v125 = vld [vmem:[#allocation6 + $0x158] sm:$0xff]
    %v126 = vld [vmem:[#allocation6 + $0x160] sm:$0xff]
    %v127 = vld [vmem:[#allocation6 + $0x168] sm:$0xff]
    %v128 = vld [vmem:[#allocation6 + $0x170] sm:$0xff]
    %v129 = vld [vmem:[#allocation6 + $0x178] sm:$0xff]
    %v130 = vld [vmem:[#allocation6 + $0x180] sm:$0xff]
    %v131 = vld [vmem:[#allocation6 + $0x188] sm:$0xff]
    %v132 = vld [vmem:[#allocation6 + $0x190] sm:$0xff]
    %v133 = vld [vmem:[#allocation6 + $0x198] sm:$0xff]
    %v134 = vld [vmem:[#allocation6 + $0x1a0] sm:$0xff]
    %v135 = vld [vmem:[#allocation6 + $0x1a8] sm:$0xff]
    %v136 = vld [vmem:[#allocation6 + $0x1b0] sm:$0xff]
    %v137 = vld [vmem:[#allocation6 + $0x1b8] sm:$0xff]
    %v138 = vld [vmem:[#allocation6 + $0x1c0] sm:$0xff]
    %v139 = vld [vmem:[#allocation6 + $0x1c8] sm:$0xff]
    %v140 = vld [vmem:[#allocation6 + $0x1d0] sm:$0xff]
    %v141 = vld [vmem:[#allocation6 + $0x1d8] sm:$0xff]
    %v142 = vld [vmem:[#allocation6 + $0x1e0] sm:$0xff]
    %v143 = vld [vmem:[#allocation6 + $0x1e8] sm:$0xff]
    %v144 = vld [vmem:[#allocation6 + $0x1f0] sm:$0xff]
    %v145 = vld [vmem:[#allocation6 + $0x1f8] sm:$0xff]
    %v146 = vld [vmem:[%s2] sm:$0x3]
    %v148 = vlaneseq
    %v149 = vshrl.u32 %v148, 7
    %v150 = vsub.s32 0, %v149
    %v151 = vrot.slane %v146, %v150
    %v152 = vlaneseq
    %v153 = vshrl.u32 %v152, 7
    %v154 = vsub.s32 1, %v153
    %v155 = vrot.slane %v146, %v154
    %v222 = vunpack.c.l.b16 %v82
    %v223 = vunpack.c.h.b16 %v82
    %v224 = vunpack.c.l.b16 %v83
    %v225 = vunpack.c.h.b16 %v83
    %v226 = vunpack.c.l.b16 %v84
    %v227 = vunpack.c.h.b16 %v84
    %v228 = vunpack.c.l.b16 %v85
    %v229 = vunpack.c.h.b16 %v85
    %v230 = vunpack.c.l.b16 %v86
    %v231 = vunpack.c.h.b16 %v86
    %v232 = vunpack.c.l.b16 %v87
    %v233 = vunpack.c.h.b16 %v87
    %v234 = vunpack.c.l.b16 %v88
    %v235 = vunpack.c.h.b16 %v88
    %v236 = vunpack.c.l.b16 %v89
    %v237 = vunpack.c.h.b16 %v89
    %v238 = vunpack.c.l.b16 %v90
    %v239 = vunpack.c.h.b16 %v90
    %v240 = vunpack.c.l.b16 %v91
    %v241 = vunpack.c.h.b16 %v91
    %v242 = vunpack.c.l.b16 %v92
    %v243 = vunpack.c.h.b16 %v92
    %v244 = vunpack.c.l.b16 %v93
    %v245 = vunpack.c.h.b16 %v93
    %v246 = vunpack.c.l.b16 %v94
    %v247 = vunpack.c.h.b16 %v94
    %v248 = vunpack.c.l.b16 %v95
    %v249 = vunpack.c.h.b16 %v95
    %v250 = vunpack.c.l.b16 %v96
    %v251 = vunpack.c.h.b16 %v96
    %v252 = vunpack.c.l.b16 %v97
    %v253 = vunpack.c.h.b16 %v97
    %v254 = vunpack.c.l.b16 %v98
    %v255 = vunpack.c.h.b16 %v98
    %v256 = vunpack.c.l.b16 %v99
    %v257 = vunpack.c.h.b16 %v99
    %v258 = vunpack.c.l.b16 %v100
    %v259 = vunpack.c.h.b16 %v100
    %v260 = vunpack.c.l.b16 %v101
    %v261 = vunpack.c.h.b16 %v101
    %v262 = vunpack.c.l.b16 %v102
    %v263 = vunpack.c.h.b16 %v102
    %v264 = vunpack.c.l.b16 %v103
    %v265 = vunpack.c.h.b16 %v103
    %v266 = vunpack.c.l.b16 %v104
    %v267 = vunpack.c.h.b16 %v104
    %v268 = vunpack.c.l.b16 %v105
    %v269 = vunpack.c.h.b16 %v105
    %v270 = vunpack.c.l.b16 %v106
    %v271 = vunpack.c.h.b16 %v106
    %v272 = vunpack.c.l.b16 %v107
    %v273 = vunpack.c.h.b16 %v107
    %v274 = vunpack.c.l.b16 %v108
    %v275 = vunpack.c.h.b16 %v108
    %v276 = vunpack.c.l.b16 %v109
    %v277 = vunpack.c.h.b16 %v109
    %v278 = vunpack.c.l.b16 %v110
    %v279 = vunpack.c.h.b16 %v110
    %v280 = vunpack.c.l.b16 %v111
    %v281 = vunpack.c.h.b16 %v111
    %v282 = vunpack.c.l.b16 %v112
    %v283 = vunpack.c.h.b16 %v112
    %v284 = vunpack.c.l.b16 %v113
    %v285 = vunpack.c.h.b16 %v113
    %v286 = vunpack.c.l.b16 %v114
    %v287 = vunpack.c.h.b16 %v114
    %v288 = vunpack.c.l.b16 %v115
    %v289 = vunpack.c.h.b16 %v115
    %v290 = vunpack.c.l.b16 %v116
    %v291 = vunpack.c.h.b16 %v116
    %v292 = vunpack.c.l.b16 %v117
    %v293 = vunpack.c.h.b16 %v117
    %v294 = vunpack.c.l.b16 %v118
    %v295 = vunpack.c.h.b16 %v118
    %v296 = vunpack.c.l.b16 %v119
    %v297 = vunpack.c.h.b16 %v119
    %v298 = vunpack.c.l.b16 %v120
    %v299 = vunpack.c.h.b16 %v120
    %v300 = vunpack.c.l.b16 %v121
    %v301 = vunpack.c.h.b16 %v121
    %v302 = vunpack.c.l.b16 %v122
    %v303 = vunpack.c.h.b16 %v122
    %v304 = vunpack.c.l.b16 %v123
    %v305 = vunpack.c.h.b16 %v123
    %v306 = vunpack.c.l.b16 %v124
    %v307 = vunpack.c.h.b16 %v124
    %v308 = vunpack.c.l.b16 %v125
    %v309 = vunpack.c.h.b16 %v125
    %v310 = vunpack.c.l.b16 %v126
    %v311 = vunpack.c.h.b16 %v126
    %v312 = vunpack.c.l.b16 %v127
    %v313 = vunpack.c.h.b16 %v127
    %v314 = vunpack.c.l.b16 %v128
    %v315 = vunpack.c.h.b16 %v128
    %v316 = vunpack.c.l.b16 %v129
    %v317 = vunpack.c.h.b16 %v129
    %v318 = vunpack.c.l.b16 %v130
    %v319 = vunpack.c.h.b16 %v130
    %v320 = vunpack.c.l.b16 %v131
    %v321 = vunpack.c.h.b16 %v131
    %v322 = vunpack.c.l.b16 %v132
    %v323 = vunpack.c.h.b16 %v132
    %v324 = vunpack.c.l.b16 %v133
    %v325 = vunpack.c.h.b16 %v133
    %v326 = vunpack.c.l.b16 %v134
    %v327 = vunpack.c.h.b16 %v134
    %v328 = vunpack.c.l.b16 %v135
    %v329 = vunpack.c.h.b16 %v135
    %v330 = vunpack.c.l.b16 %v136
    %v331 = vunpack.c.h.b16 %v136
    %v332 = vunpack.c.l.b16 %v137
    %v333 = vunpack.c.h.b16 %v137
    %v334 = vunpack.c.l.b16 %v138
    %v335 = vunpack.c.h.b16 %v138
    %v336 = vunpack.c.l.b16 %v139
    %v337 = vunpack.c.h.b16 %v139
    %v338 = vunpack.c.l.b16 %v140
    %v339 = vunpack.c.h.b16 %v140
    %v340 = vunpack.c.l.b16 %v141
    %v341 = vunpack.c.h.b16 %v141
    %v342 = vunpack.c.l.b16 %v142
    %v343 = vunpack.c.h.b16 %v142
    %v344 = vunpack.c.l.b16 %v143
    %v345 = vunpack.c.h.b16 %v143
    %v346 = vunpack.c.l.b16 %v144
    %v347 = vunpack.c.h.b16 %v144
    %v348 = vunpack.c.l.b16 %v145
    %v349 = vunpack.c.h.b16 %v145
    %v350 = vpack.c.b16 %v224, %v222
    %v351 = vpack.c.b16 %v225, %v223
    %v352 = vpack.c.b16 %v228, %v226
    %v353 = vpack.c.b16 %v229, %v227
    %v354 = vpack.c.b16 %v232, %v230
    %v355 = vpack.c.b16 %v233, %v231
    %v356 = vpack.c.b16 %v236, %v234
    %v357 = vpack.c.b16 %v237, %v235
    %v358 = vpack.c.b16 %v240, %v238
    %v359 = vpack.c.b16 %v241, %v239
    %v360 = vpack.c.b16 %v244, %v242
    %v361 = vpack.c.b16 %v245, %v243
    %v362 = vpack.c.b16 %v248, %v246
    %v363 = vpack.c.b16 %v249, %v247
    %v364 = vpack.c.b16 %v252, %v250
    %v365 = vpack.c.b16 %v253, %v251
    %v366 = vpack.c.b16 %v256, %v254
    %v367 = vpack.c.b16 %v257, %v255
    %v368 = vpack.c.b16 %v260, %v258
    %v369 = vpack.c.b16 %v261, %v259
    %v370 = vpack.c.b16 %v264, %v262
    %v371 = vpack.c.b16 %v265, %v263
    %v372 = vpack.c.b16 %v268, %v266
    %v373 = vpack.c.b16 %v269, %v267
    %v374 = vpack.c.b16 %v272, %v270
    %v375 = vpack.c.b16 %v273, %v271
    %v376 = vpack.c.b16 %v276, %v274
    %v377 = vpack.c.b16 %v277, %v275
    %v378 = vpack.c.b16 %v280, %v278
    %v379 = vpack.c.b16 %v281, %v279
    %v380 = vpack.c.b16 %v284, %v282
    %v381 = vpack.c.b16 %v285, %v283
    %v382 = vpack.c.b16 %v288, %v286
    %v383 = vpack.c.b16 %v289, %v287
    %v384 = vpack.c.b16 %v292, %v290
    %v385 = vpack.c.b16 %v293, %v291
    %v386 = vpack.c.b16 %v296, %v294
    %v387 = vpack.c.b16 %v297, %v295
    %v388 = vpack.c.b16 %v300, %v298
    %v389 = vpack.c.b16 %v301, %v299
    %v390 = vpack.c.b16 %v304, %v302
    %v391 = vpack.c.b16 %v305, %v303
    %v392 = vpack.c.b16 %v308, %v306
    %v393 = vpack.c.b16 %v309, %v307
    %v394 = vpack.c.b16 %v312, %v310
    %v395 = vpack.c.b16 %v313, %v311
    %v396 = vpack.c.b16 %v316, %v314
    %v397 = vpack.c.b16 %v317, %v315
    %v398 = vpack.c.b16 %v320, %v318
    %v399 = vpack.c.b16 %v321, %v319
    %v400 = vpack.c.b16 %v324, %v322
    %v401 = vpack.c.b16 %v325, %v323
    %v402 = vpack.c.b16 %v328, %v326
    %v403 = vpack.c.b16 %v329, %v327
    %v404 = vpack.c.b16 %v332, %v330
    %v405 = vpack.c.b16 %v333, %v331
    %v406 = vpack.c.b16 %v336, %v334
    %v407 = vpack.c.b16 %v337, %v335
    %v408 = vpack.c.b16 %v340, %v338
    %v409 = vpack.c.b16 %v341, %v339
    %v410 = vpack.c.b16 %v344, %v342
    %v411 = vpack.c.b16 %v345, %v343
    %v412 = vpack.c.b16 %v348, %v346
    %v413 = vpack.c.b16 %v349, %v347
    %478 = vmatprep.subr.bf16.mxu0 %v351
    %479 = vmatpush1.bf16.msra.mxu0 %v350
    %480 = vmatprep.subr.bf16.mxu0 %v353
    %481 = vmatpush1.bf16.msra.mxu0 %v352
    %482 = vmatprep.subr.bf16.mxu0 %v355
    %483 = vmatpush1.bf16.msra.mxu0 %v354
    %484 = vmatprep.subr.bf16.mxu0 %v357
    %485 = vmatpush1.bf16.msra.mxu0 %v356
    %486 = vmatprep.subr.bf16.mxu0 %v359
    %487 = vmatpush1.bf16.msra.mxu0 %v358
    %488 = vmatprep.subr.bf16.mxu0 %v361
    %489 = vmatpush1.bf16.msra.mxu0 %v360
    %490 = vmatprep.subr.bf16.mxu0 %v363
    %491 = vmatpush1.bf16.msra.mxu0 %v362
    %492 = vmatprep.subr.bf16.mxu0 %v365
    %493 = vmatpush1.bf16.msra.mxu0 %v364
    %494 = vmatprep.subr.bf16.mxu0 %v367
    %495 = vmatpush1.bf16.msra.mxu0 %v366
    %496 = vmatprep.subr.bf16.mxu0 %v369
    %497 = vmatpush1.bf16.msra.mxu0 %v368
    %498 = vmatprep.subr.bf16.mxu0 %v371
    %499 = vmatpush1.bf16.msra.mxu0 %v370
    %500 = vmatprep.subr.bf16.mxu0 %v373
    %501 = vmatpush1.bf16.msra.mxu0 %v372
    %502 = vmatprep.subr.bf16.mxu0 %v375
    %503 = vmatpush1.bf16.msra.mxu0 %v374
    %504 = vmatprep.subr.bf16.mxu0 %v377
    %505 = vmatpush1.bf16.msra.mxu0 %v376
    %506 = vmatprep.subr.bf16.mxu0 %v379
    %507 = vmatpush1.bf16.msra.mxu0 %v378
    %508 = vmatprep.subr.bf16.mxu0 %v381
    %509 = vmatpush1.bf16.msra.mxu0 %v380
    %510 = vmatprep.mubr.bf16.mxu0 %v79
    %511 = vmatmul.mubr.bf16.gmra.mrb[0].mxu0 %v78
    %v512 = vpop.f32.mrb[0].mxu0
    %v513 = vadd.f32 %v151, %v512
    %v514 = vpop.f32.mrb[0].mxu0
    %v515 = vadd.f32 %v155, %v514
    %v516 = vpop.f32.mrb[0].mxu0
    %v517 = vpop.f32.mrb[0].mxu0
    %518 = vdwg.mxu0
    %519 = vmatprep.subr.bf16.mxu0 %v383
    %520 = vmatpush1.bf16.msra.mxu0 %v382
    %521 = vmatprep.subr.bf16.mxu0 %v385
    %522 = vmatpush1.bf16.msra.mxu0 %v384
    %523 = vmatprep.subr.bf16.mxu0 %v387
    %524 = vmatpush1.bf16.msra.mxu0 %v386
    %525 = vmatprep.subr.bf16.mxu0 %v389
    %526 = vmatpush1.bf16.msra.mxu0 %v388
    %527 = vmatprep.subr.bf16.mxu0 %v391
    %528 = vmatpush1.bf16.msra.mxu0 %v390
    %529 = vmatprep.subr.bf16.mxu0 %v393
    %530 = vmatpush1.bf16.msra.mxu0 %v392
    %531 = vmatprep.subr.bf16.mxu0 %v395
    %532 = vmatpush1.bf16.msra.mxu0 %v394
    %533 = vmatprep.subr.bf16.mxu0 %v397
    %534 = vmatpush1.bf16.msra.mxu0 %v396
    %535 = vmatprep.subr.bf16.mxu0 %v399
    %536 = vmatpush1.bf16.msra.mxu0 %v398
    %537 = vmatprep.subr.bf16.mxu0 %v401
    %538 = vmatpush1.bf16.msra.mxu0 %v400
    %539 = vmatprep.subr.bf16.mxu0 %v403
    %540 = vmatpush1.bf16.msra.mxu0 %v402
    %541 = vmatprep.subr.bf16.mxu0 %v405
    %542 = vmatpush1.bf16.msra.mxu0 %v404
    %543 = vmatprep.subr.bf16.mxu0 %v407
    %544 = vmatpush1.bf16.msra.mxu0 %v406
    %545 = vmatprep.subr.bf16.mxu0 %v409
    %546 = vmatpush1.bf16.msra.mxu0 %v408
    %547 = vmatprep.subr.bf16.mxu0 %v411
    %548 = vmatpush1.bf16.msra.mxu0 %v410
    %549 = vmatprep.subr.bf16.mxu0 %v413
    %550 = vmatpush1.bf16.msra.mxu0 %v412
    %551 = vmatprep.mubr.bf16.mxu0 %v81
    %552 = vmatmul.mubr.bf16.gmra.mrb[0].mxu0 %v80
    %v553 = vpop.f32.mrb[0].mxu0
    %v554 = vadd.f32 %v513, %v553
    %v555 = vpop.f32.mrb[0].mxu0
    %v556 = vadd.f32 %v515, %v555
    %v557 = vpop.f32.mrb[0].mxu0
    %v558 = vpop.f32.mrb[0].mxu0
    %559 = vdwg.mxu0
    %v560 = vpack.c.bf16 %v554, %v554
    %v561 = vpack.c.bf16 %v556, %v556
    %v562 = vtanh.bf16.pop %v560
    %v563 = vtanh.bf16.pop %v561
    %v564 = vld [vmem:[%s3] sm:$0xf]
    %v565 = vld [vmem:[%s3 + $0x4] sm:$0xf]
    %v566 = vld [vmem:[%s3 + $0x8] sm:$0xf]
    %v567 = vld [vmem:[%s3 + $0xc] sm:$0xf]
    %v568 = vld [vmem:[%s3 + $0x10] sm:$0xf]
    %v569 = vld [vmem:[%s3 + $0x14] sm:$0xf]
    %v570 = vld [vmem:[%s3 + $0x18] sm:$0xf]
    %v571 = vld [vmem:[%s3 + $0x1c] sm:$0xf]
    %v572 = vld [vmem:[%s3 + $0x20] sm:$0xf]
    %v573 = vld [vmem:[%s3 + $0x24] sm:$0xf]
    %v574 = vld [vmem:[%s3 + $0x28] sm:$0xf]
    %v575 = vld [vmem:[%s3 + $0x2c] sm:$0xf]
    %v576 = vld [vmem:[%s3 + $0x30] sm:$0xf]
    %v577 = vld [vmem:[%s3 + $0x34] sm:$0xf]
    %v578 = vld [vmem:[%s3 + $0x38] sm:$0xf]
    %v579 = vld [vmem:[%s3 + $0x3c] sm:$0xf]
    %v580 = vld [vmem:[%s3 + $0x40] sm:$0xf]
    %v581 = vld [vmem:[%s3 + $0x44] sm:$0xf]
    %v582 = vld [vmem:[%s3 + $0x48] sm:$0xf]
    %v583 = vld [vmem:[%s3 + $0x4c] sm:$0xf]
    %v584 = vld [vmem:[%s3 + $0x50] sm:$0xf]
    %v585 = vld [vmem:[%s3 + $0x54] sm:$0xf]
    %v586 = vld [vmem:[%s3 + $0x58] sm:$0xf]
    %v587 = vld [vmem:[%s3 + $0x5c] sm:$0xf]
    %v588 = vld [vmem:[%s3 + $0x60] sm:$0xf]
    %v589 = vld [vmem:[%s3 + $0x64] sm:$0xf]
    %v590 = vld [vmem:[%s3 + $0x68] sm:$0xf]
    %v591 = vld [vmem:[%s3 + $0x6c] sm:$0xf]
    %v592 = vld [vmem:[%s3 + $0x70] sm:$0xf]
    %v593 = vld [vmem:[%s3 + $0x74] sm:$0xf]
    %v594 = vld [vmem:[%s3 + $0x78] sm:$0xf]
    %v595 = vld [vmem:[%s3 + $0x7c] sm:$0xf]
    %v596 = vld [vmem:[%s4] sm:$0x1]
    %v598 = vlaneseq
    %v599 = vshrl.u32 %v598, 7
    %v600 = vsub.s32 0, %v599
    %v601 = vrot.slane %v596, %v600
    %v635 = vunpack.c.l.b16 %v564
    %v636 = vunpack.c.l.b16 %v565
    %v637 = vunpack.c.l.b16 %v566
    %v638 = vunpack.c.l.b16 %v567
    %v639 = vunpack.c.l.b16 %v568
    %v640 = vunpack.c.l.b16 %v569
    %v641 = vunpack.c.l.b16 %v570
    %v642 = vunpack.c.l.b16 %v571
    %v643 = vunpack.c.l.b16 %v572
    %v644 = vunpack.c.l.b16 %v573
    %v645 = vunpack.c.l.b16 %v574
    %v646 = vunpack.c.l.b16 %v575
    %v647 = vunpack.c.l.b16 %v576
    %v648 = vunpack.c.l.b16 %v577
    %v649 = vunpack.c.l.b16 %v578
    %v650 = vunpack.c.l.b16 %v579
    %v651 = vunpack.c.l.b16 %v580
    %v652 = vunpack.c.l.b16 %v581
    %v653 = vunpack.c.l.b16 %v582
    %v654 = vunpack.c.l.b16 %v583
    %v655 = vunpack.c.l.b16 %v584
    %v656 = vunpack.c.l.b16 %v585
    %v657 = vunpack.c.l.b16 %v586
    %v658 = vunpack.c.l.b16 %v587
    %v659 = vunpack.c.l.b16 %v588
    %v660 = vunpack.c.l.b16 %v589
    %v661 = vunpack.c.l.b16 %v590
    %v662 = vunpack.c.l.b16 %v591
    %v663 = vunpack.c.l.b16 %v592
    %v664 = vunpack.c.l.b16 %v593
    %v665 = vunpack.c.l.b16 %v594
    %v666 = vunpack.c.l.b16 %v595
    %v667 = vpack.c.b16 %v636, %v635
    %v668 = vpack.c.b16 %v638, %v637
    %v669 = vpack.c.b16 %v640, %v639
    %v670 = vpack.c.b16 %v642, %v641
    %v671 = vpack.c.b16 %v644, %v643
    %v672 = vpack.c.b16 %v646, %v645
    %v673 = vpack.c.b16 %v648, %v647
    %v674 = vpack.c.b16 %v650, %v649
    %v675 = vpack.c.b16 %v652, %v651
    %v676 = vpack.c.b16 %v654, %v653
    %v677 = vpack.c.b16 %v656, %v655
    %v678 = vpack.c.b16 %v658, %v657
    %v679 = vpack.c.b16 %v660, %v659
    %v680 = vpack.c.b16 %v662, %v661
    %v681 = vpack.c.b16 %v664, %v663
    %v682 = vpack.c.b16 %v666, %v665
    %699 = vmatprep.subr.bf16.mxu0 0
    %700 = vmatpush1.bf16.msra.mxu0 %v667
    %701 = vmatprep.subr.bf16.mxu0 0
    %702 = vmatpush1.bf16.msra.mxu0 %v668
    %703 = vmatprep.subr.bf16.mxu0 0
    %704 = vmatpush1.bf16.msra.mxu0 %v669
    %705 = vmatprep.subr.bf16.mxu0 0
    %706 = vmatpush1.bf16.msra.mxu0 %v670
    %707 = vmatprep.subr.bf16.mxu0 0
    %708 = vmatpush1.bf16.msra.mxu0 %v671
    %709 = vmatprep.subr.bf16.mxu0 0
    %710 = vmatpush1.bf16.msra.mxu0 %v672
    %711 = vmatprep.subr.bf16.mxu0 0
    %712 = vmatpush1.bf16.msra.mxu0 %v673
    %713 = vmatprep.subr.bf16.mxu0 0
    %714 = vmatpush1.bf16.msra.mxu0 %v674
    %715 = vmatprep.subr.bf16.mxu0 0
    %716 = vmatpush1.bf16.msra.mxu0 %v675
    %717 = vmatprep.subr.bf16.mxu0 0
    %718 = vmatpush1.bf16.msra.mxu0 %v676
    %719 = vmatprep.subr.bf16.mxu0 0
    %720 = vmatpush1.bf16.msra.mxu0 %v677
    %721 = vmatprep.subr.bf16.mxu0 0
    %722 = vmatpush1.bf16.msra.mxu0 %v678
    %723 = vmatprep.subr.bf16.mxu0 0
    %724 = vmatpush1.bf16.msra.mxu0 %v679
    %725 = vmatprep.subr.bf16.mxu0 0
    %726 = vmatpush1.bf16.msra.mxu0 %v680
    %727 = vmatprep.subr.bf16.mxu0 0
    %728 = vmatpush1.bf16.msra.mxu0 %v681
    %729 = vmatprep.subr.bf16.mxu0 0
    %730 = vmatpush1.bf16.msra.mxu0 %v682
    %731 = vmatprep.mubr.bf16.mxu0 %v563
    %732 = vmatmul.mubr.bf16.gmra.mrb[0].mxu0 %v562
    %v733 = vpop.f32.mrb[0].mxu0
    %v734 = vadd.f32 %v601, %v733
    %v735 = vpop.f32.mrb[0].mxu0
    %v736 = vpop.f32.mrb[0].mxu0
    %v737 = vpop.f32.mrb[0].mxu0
    %738 = vdwg.mxu0
    %v739 = vpack.c.bf16 %v734, %v734
    %v740 = vtanh.bf16.pop %v739
    %v741 = vld [vmem:[%s5] sm:$0xf]
    %v742 = vld [vmem:[%s5 + $0x4] sm:$0xf]
    %v743 = vld [vmem:[%s5 + $0x8] sm:$0xf]
    %v744 = vld [vmem:[%s5 + $0xc] sm:$0xf]
    %v745 = vld [vmem:[%s5 + $0x10] sm:$0xf]
    %v746 = vld [vmem:[%s5 + $0x14] sm:$0xf]
    %v747 = vld [vmem:[%s5 + $0x18] sm:$0xf]
    %v748 = vld [vmem:[%s5 + $0x1c] sm:$0xf]
    %v749 = vld [vmem:[%s5 + $0x20] sm:$0xf]
    %v750 = vld [vmem:[%s5 + $0x24] sm:$0xf]
    %v751 = vld [vmem:[%s5 + $0x28] sm:$0xf]
    %v752 = vld [vmem:[%s5 + $0x2c] sm:$0xf]
    %v753 = vld [vmem:[%s5 + $0x30] sm:$0xf]
    %v754 = vld [vmem:[%s5 + $0x34] sm:$0xf]
    %v755 = vld [vmem:[%s5 + $0x38] sm:$0xf]
    %v756 = vld [vmem:[%s5 + $0x3c] sm:$0xf]
    %v757 = vld [vmem:[%s6] sm:$0x1]
    %v759 = vlaneseq
    %v760 = vshrl.u32 %v759, 7
    %v761 = vsub.s32 0, %v760
    %v762 = vrot.slane %v757, %v761
    %v780 = vunpack.c.l.b16 %v741
    %v781 = vunpack.c.l.b16 %v742
    %v782 = vunpack.c.l.b16 %v743
    %v783 = vunpack.c.l.b16 %v744
    %v784 = vunpack.c.l.b16 %v745
    %v785 = vunpack.c.l.b16 %v746
    %v786 = vunpack.c.l.b16 %v747
    %v787 = vunpack.c.l.b16 %v748
    %v788 = vunpack.c.l.b16 %v749
    %v789 = vunpack.c.l.b16 %v750
    %v790 = vunpack.c.l.b16 %v751
    %v791 = vunpack.c.l.b16 %v752
    %v792 = vunpack.c.l.b16 %v753
    %v793 = vunpack.c.l.b16 %v754
    %v794 = vunpack.c.l.b16 %v755
    %v795 = vunpack.c.l.b16 %v756
    %v796 = vpack.c.b16 %v781, %v780
    %v797 = vpack.c.b16 %v783, %v782
    %v798 = vpack.c.b16 %v785, %v784
    %v799 = vpack.c.b16 %v787, %v786
    %v800 = vpack.c.b16 %v789, %v788
    %v801 = vpack.c.b16 %v791, %v790
    %v802 = vpack.c.b16 %v793, %v792
    %v803 = vpack.c.b16 %v795, %v794
    %812 = vmatprep.subr.bf16.mxu0 0
    %813 = vmatpush1.bf16.msra.mxu0 %v796
    %814 = vmatprep.subr.bf16.mxu0 0
    %815 = vmatpush1.bf16.msra.mxu0 %v797
    %816 = vmatprep.subr.bf16.mxu0 0
    %817 = vmatpush1.bf16.msra.mxu0 %v798
    %818 = vmatprep.subr.bf16.mxu0 0
    %819 = vmatpush1.bf16.msra.mxu0 %v799
    %820 = vmatprep.subr.bf16.mxu0 0
    %821 = vmatpush1.bf16.msra.mxu0 %v800
    %822 = vmatprep.subr.bf16.mxu0 0
    %823 = vmatpush1.bf16.msra.mxu0 %v801
    %824 = vmatprep.subr.bf16.mxu0 0
    %825 = vmatpush1.bf16.msra.mxu0 %v802
    %826 = vmatprep.subr.bf16.mxu0 0
    %827 = vmatpush1.bf16.msra.mxu0 %v803
    %828 = vmatprep.subr.bf16.mxu0 0
    %829 = vmatpush1.bf16.msra.mxu0 0
    %830 = vmatprep.subr.bf16.mxu0 0
    %831 = vmatpush1.bf16.msra.mxu0 0
    %832 = vmatprep.subr.bf16.mxu0 0
    %833 = vmatpush1.bf16.msra.mxu0 0
    %834 = vmatprep.subr.bf16.mxu0 0
    %835 = vmatpush1.bf16.msra.mxu0 0
    %836 = vmatprep.subr.bf16.mxu0 0
    %837 = vmatpush1.bf16.msra.mxu0 0
    %838 = vmatprep.subr.bf16.mxu0 0
    %839 = vmatpush1.bf16.msra.mxu0 0
    %840 = vmatprep.subr.bf16.mxu0 0
    %841 = vmatpush1.bf16.msra.mxu0 0
    %842 = vmatprep.subr.bf16.mxu0 0
    %843 = vmatpush1.bf16.msra.mxu0 0
    %844 = vmatprep.mubr.bf16.mxu0 0
    %845 = vmatmul.mubr.bf16.gmra.mrb[0].mxu0 %v740
    %v846 = vpop.f32.mrb[0].mxu0
    %v847 = vadd.f32 %v762, %v846
    %v848 = vpop.f32.mrb[0].mxu0
    %v849 = vpop.f32.mrb[0].mxu0
    %v850 = vpop.f32.mrb[0].mxu0
    %851 = vdwg.mxu0
    %v852 = vpack.c.bf16 %v847, %v847
    %v853 = vtanh.bf16.pop %v852
    %v854 = vld [vmem:[%s7] sm:$0xf]
    %v855 = vld [vmem:[%s7 + $0x4] sm:$0xf]
    %v856 = vld [vmem:[%s7 + $0x8] sm:$0xf]
    %v857 = vld [vmem:[%s7 + $0xc] sm:$0xf]
    %v858 = vld [vmem:[%s7 + $0x10] sm:$0xf]
    %v859 = vld [vmem:[%s7 + $0x14] sm:$0xf]
    %v860 = vld [vmem:[%s7 + $0x18] sm:$0xf]
    %v861 = vld [vmem:[%s7 + $0x1c] sm:$0xf]
    %v862 = vld [vmem:[%s8] sm:$0x1]
    %v864 = vlaneseq
    %v865 = vshrl.u32 %v864, 7
    %v866 = vsub.s32 0, %v865
    %v867 = vrot.slane %v862, %v866
    %v877 = vunpack.c.l.b16 %v854
    %v878 = vunpack.c.l.b16 %v855
    %v879 = vunpack.c.l.b16 %v856
    %v880 = vunpack.c.l.b16 %v857
    %v881 = vunpack.c.l.b16 %v858
    %v882 = vunpack.c.l.b16 %v859
    %v883 = vunpack.c.l.b16 %v860
    %v884 = vunpack.c.l.b16 %v861
    %v885 = vpack.c.b16 %v878, %v877
    %v886 = vpack.c.b16 %v880, %v879
    %v887 = vpack.c.b16 %v882, %v881
    %v888 = vpack.c.b16 %v884, %v883
    %vm893 = vcmask 523264
    %v895 = vsel %vm893, %v853, 0
    %897 = vmatprep.subr.bf16.mxu0 0
    %898 = vmatpush1.bf16.msra.mxu0 %v885
    %899 = vmatprep.subr.bf16.mxu0 0
    %900 = vmatpush1.bf16.msra.mxu0 %v886
    %901 = vmatprep.subr.bf16.mxu0 0
    %902 = vmatpush1.bf16.msra.mxu0 %v887
    %903 = vmatprep.subr.bf16.mxu0 0
    %904 = vmatpush1.bf16.msra.mxu0 %v888
    %905 = vmatprep.subr.bf16.mxu0 0
    %906 = vmatpush1.bf16.msra.mxu0 0
    %907 = vmatprep.subr.bf16.mxu0 0
    %908 = vmatpush1.bf16.msra.mxu0 0
    %909 = vmatprep.subr.bf16.mxu0 0
    %910 = vmatpush1.bf16.msra.mxu0 0
    %911 = vmatprep.subr.bf16.mxu0 0
    %912 = vmatpush1.bf16.msra.mxu0 0
    %913 = vmatprep.subr.bf16.mxu0 0
    %914 = vmatpush1.bf16.msra.mxu0 0
    %915 = vmatprep.subr.bf16.mxu0 0
    %916 = vmatpush1.bf16.msra.mxu0 0
    %917 = vmatprep.subr.bf16.mxu0 0
    %918 = vmatpush1.bf16.msra.mxu0 0
    %919 = vmatprep.subr.bf16.mxu0 0
    %920 = vmatpush1.bf16.msra.mxu0 0
    %921 = vmatprep.subr.bf16.mxu0 0
    %922 = vmatpush1.bf16.msra.mxu0 0
    %923 = vmatprep.subr.bf16.mxu0 0
    %924 = vmatpush1.bf16.msra.mxu0 0
    %925 = vmatprep.subr.bf16.mxu0 0
    %926 = vmatpush1.bf16.msra.mxu0 0
    %927 = vmatprep.subr.bf16.mxu0 0
    %928 = vmatpush1.bf16.msra.mxu0 0
    %929 = vmatprep.mubr.bf16.mxu0 0
    %930 = vmatmul.mubr.bf16.gmra.mrb[0].mxu0 %v895
    %v931 = vpop.f32.mrb[0].mxu0
    %v932 = vadd.f32 %v867, %v931
    %v933 = vpop.f32.mrb[0].mxu0
    %v934 = vpop.f32.mrb[0].mxu0
    %v935 = vpop.f32.mrb[0].mxu0
    %936 = vdwg.mxu0
    %v937 = vpack.c.bf16 %v932, %v932
    %v938 = vtanh.bf16.pop %v937
    %v939 = vld [vmem:[%s9] sm:$0xf]
    %v940 = vld [vmem:[%s9 + $0x4] sm:$0xf]
    %v941 = vld [vmem:[%s9 + $0x8] sm:$0xf]
    %v942 = vld [vmem:[%s9 + $0xc] sm:$0xf]
    %v943 = vld [vmem:[%s10] sm:$0x1]
    %v945 = vlaneseq
    %v946 = vshrl.u32 %v945, 7
    %v947 = vsub.s32 0, %v946
    %v948 = vrot.slane %v943, %v947
    %v954 = vunpack.c.l.b16 %v939
    %v955 = vunpack.c.l.b16 %v940
    %v956 = vunpack.c.l.b16 %v941
    %v957 = vunpack.c.l.b16 %v942
    %v958 = vpack.c.b16 %v955, %v954
    %v959 = vpack.c.b16 %v957, %v956
    %vm962 = vcmask 261120
    %v964 = vsel %vm962, %v938, 0
    %966 = vmatprep.subr.bf16.mxu0 0
    %967 = vmatpush1.bf16.msra.mxu0 %v958
    %968 = vmatprep.subr.bf16.mxu0 0
    %969 = vmatpush1.bf16.msra.mxu0 %v959
    %970 = vmatprep.subr.bf16.mxu0 0
    %971 = vmatpush1.bf16.msra.mxu0 0
    %972 = vmatprep.subr.bf16.mxu0 0
    %973 = vmatpush1.bf16.msra.mxu0 0
    %974 = vmatprep.subr.bf16.mxu0 0
    %975 = vmatpush1.bf16.msra.mxu0 0
    %976 = vmatprep.subr.bf16.mxu0 0
    %977 = vmatpush1.bf16.msra.mxu0 0
    %978 = vmatprep.subr.bf16.mxu0 0
    %979 = vmatpush1.bf16.msra.mxu0 0
    %980 = vmatprep.subr.bf16.mxu0 0
    %981 = vmatpush1.bf16.msra.mxu0 0
    %982 = vmatprep.subr.bf16.mxu0 0
    %983 = vmatpush1.bf16.msra.mxu0 0
    %984 = vmatprep.subr.bf16.mxu0 0
    %985 = vmatpush1.bf16.msra.mxu0 0
    %986 = vmatprep.subr.bf16.mxu0 0
    %987 = vmatpush1.bf16.msra.mxu0 0
    %988 = vmatprep.subr.bf16.mxu0 0
    %989 = vmatpush1.bf16.msra.mxu0 0
    %990 = vmatprep.subr.bf16.mxu0 0
    %991 = vmatpush1.bf16.msra.mxu0 0
    %992 = vmatprep.subr.bf16.mxu0 0
    %993 = vmatpush1.bf16.msra.mxu0 0
    %994 = vmatprep.subr.bf16.mxu0 0
    %995 = vmatpush1.bf16.msra.mxu0 0
    %996 = vmatprep.subr.bf16.mxu0 0
    %997 = vmatpush1.bf16.msra.mxu0 0
    %998 = vmatprep.mubr.bf16.mxu0 0
    %999 = vmatmul.mubr.bf16.gmra.mrb[0].mxu0 %v964
    %v1000 = vpop.f32.mrb[0].mxu0
    %v1001 = vadd.f32 %v948, %v1000
    %v1002 = vpop.f32.mrb[0].mxu0
    %v1003 = vpop.f32.mrb[0].mxu0
    %v1004 = vpop.f32.mrb[0].mxu0
    %1005 = vdwg.mxu0
    %v1006 = vtanh.pop %v1001
    %v1007 = vld [vmem:[%s11] sm:$0x1]
    %v1009 = vlaneseq
    %v1010 = vshrl.u32 %v1009, 7
    %v1011 = vsub.s32 0, %v1010
    %v1012 = vrot.slane %v1007, %v1011
    %v1014 = vmul.f32 %v1006, %v1012
    %vm1015 = vcmask 130048
    %v1016 = vsel %vm1015, %v1014, 0.0
    %1017 = vadd.xlane.f32.xlu0 %v1016
    %v1018 = vpop.xlane.xlu0 %1017
    %v1019 = vld [vmem:[#allocation2] sm:$0x1]
    %v1021 = vlaneseq
    %v1022 = vshrl.u32 %v1021, 7
    %v1023 = vsub.s32 0, %v1022
    %v1024 = vrot.slane %v1019, %v1023
    %v1026 = vadd.f32 %v1018, %v1024
    %1027 = vxpose.xlu0.b32.start [1/16] %v1026, 128
    %1028 = vxpose.xlu0.b32.cont [2/16] 0.0, 128
    %1029 = vxpose.xlu0.b32.cont [3/16] 0.0, 128
    %1030 = vxpose.xlu0.b32.cont [4/16] 0.0, 128
    %1031 = vxpose.xlu0.b32.cont [5/16] 0.0, 128
    %1032 = vxpose.xlu0.b32.cont [6/16] 0.0, 128
    %1033 = vxpose.xlu0.b32.cont [7/16] 0.0, 128
    %1034 = vxpose.xlu0.b32.cont [8/16] 0.0, 128
    %1035 = vxpose.xlu0.b32.cont [9/16] 0.0, 128
    %1036 = vxpose.xlu0.b32.cont [10/16] 0.0, 128
    %1037 = vxpose.xlu0.b32.cont [11/16] 0.0, 128
    %1038 = vxpose.xlu0.b32.cont [12/16] 0.0, 128
    %1039 = vxpose.xlu0.b32.cont [13/16] 0.0, 128
    %1040 = vxpose.xlu0.b32.cont [14/16] 0.0, 128
    %1041 = vxpose.xlu0.b32.cont [15/16] 0.0, 128
    %1042 = vxpose.xlu0.b32.end [16/16] 0.0, 128
    %v1043 = vpop.trf.xlu0
    %v1044 = vpop.trf.xlu0
    %v1045 = vpop.trf.xlu0
    %v1046 = vpop.trf.xlu0
    %v1047 = vpop.trf.xlu0
    %v1048 = vpop.trf.xlu0
    %v1049 = vpop.trf.xlu0
    %v1050 = vpop.trf.xlu0
    %v1051 = vpop.trf.xlu0
    %v1052 = vpop.trf.xlu0
    %v1053 = vpop.trf.xlu0
    %v1054 = vpop.trf.xlu0
    %v1055 = vpop.trf.xlu0
    %v1056 = vpop.trf.xlu0
    %v1057 = vpop.trf.xlu0
    %v1058 = vpop.trf.xlu0
    %vm1059 = vcmask 57344
    %1060 = vst.msk [vmem:[#allocation8] sm:$0x1] %vm1059, %v1043
    // Predicated region
    $region62: #{tpu_custom_call.1} parent=1 // pred_check
      _
    $region63: #{tpu_custom_call.1} parent=1 // pred_check_branch
      %1062 = sbr.rel (0) target = $region65
    $region64: #{tpu_custom_call.1} parent=1 // pred_region
      %s1064 = ssub.s32 16, 16
      %1065 = vsyncadd [#allocation5], %s1064
      %s1067 = sshll.u32 [#allocation8], 4
      %s1068 = int_to_ptr.vmem [resolvable:$true] %s1067
      %1070 = dma.vmem_to_hbm [thread:$0]  %s1068, 16, %s13, [#allocation5]
    $region65: #{tpu_custom_call.1} parent=1 // pred_fallthru
      _
    // Predicated region
    $region66: #{tpu_custom_call.1} parent=1 // pred_check
      _
    $region67: #{tpu_custom_call.1} parent=1 // pred_check_branch
      %1072 = sbr.rel (0) target = $region69
    $region68: #{tpu_custom_call.1} parent=1 // pred_region
      %1073 = dma.done [#allocation5], 16
    $region69: #{tpu_custom_call.1} parent=1 // pred_fallthru
      _
    %1074 = vsyncpa [#allocation4], 1
    %1075 = vsyncpa [#allocation7], 1
    %1076 = vsyncpa [#allocation5], 1

</llo_original>
